<compile_context>
chip_gen: v5e
topology: v5e:2x2
jax: 0.10.0
libtpu: 0.0.40
codegen_flags: <defaults>
</compile_context>

<pallas_src>
import functools

import jax
import jax.numpy as jnp
from jax import lax
from jax.experimental import pallas as pl
from jax.experimental.pallas import tpu as pltpu


def _round_up(x, m):
    return (x + m - 1) // m * m


def _multi_scale_rbf_sum(t_base, multipliers, use_pow2):
    """sum_m exp(-d2 / (bw * m)).

    pow2 path: t_base = -d2/(4*bw); one EUP exp, the other four scales come
    from repeated squaring on the VALU (which has slack):
        eq = exp(t_base)   (m=4)      eh = eq^2  (m=2)      e  = eh^2 (m=1)
        e2 = e^2           (m=1/2)    e4 = e2^2  (m=1/4)
    general path: t_base = -d2/bw, one exp per multiplier with static 1/m.
    """
    if use_pow2:
        eq = jnp.exp(t_base)
        eh = eq * eq
        e = eh * eh
        e2 = e * e
        e4 = e2 * e2
        return e4 + e2 + e + eh + eq
    k = None
    for m in multipliers:
        term = jnp.exp(t_base * (1.0 / m))  # static 1/m folded at compile time
        k = term if k is None else k + term
    return k


def _mmd_tile_kernel(zr_ref, zc_ref, sqr_ref, sqc_ref, ar_ref, ac_ref, out_ref,
                     *, multipliers, use_pow2):
    """One (row_tile x col_tile) tile of the weighted multi-scale kernel sum."""
    j = pl.program_id(1)

    @pl.when(j == 0)
    def _():
        out_ref[...] = jnp.zeros_like(out_ref)

    # Gram tile on the MXU. Row operand was pre-scaled by 2*base in the
    # wrapper, so g already equals (z_i . z_j) * 2 * base (f32 accumulate).
    g = lax.dot_general(
        zr_ref[...], zc_ref[...],
        dimension_numbers=(((1,), (1,)), ((), ())),
        preferred_element_type=jnp.float32)                 # (TM, TN)

    # t_base = -d2 * base = g - sq'_i - sq'_j ; clamp at 0 since d2 >= 0.
    # sq' rows/cols arrive pre-scaled and pre-transposed (no in-kernel .T).
    t_base = jnp.minimum(g - sqr_ref[...] - sqc_ref[...], 0.0)

    k = _multi_scale_rbf_sum(t_base, multipliers, use_pow2)

    # Signed quadrant weights: w_ij = a_i * a_j reproduces XX - 2*XY + YY
    # (padded rows/cols have weight 0 and drop out).
    s = jnp.sum(ar_ref[...] * k * ac_ref[...])

    # Per-row-tile scalar accumulator, broadcast into one (1,8,128) vreg block;
    # the wrapper reads element [i, 0, 0] of each block and sums over i.
    out_ref[...] += s


def mmd_loss(x, y, n_kernels=5, mul_factor=2.0, bandwidth=None,
             block_size=256, use_bf16_matmul=False):
    """MMD loss with multi-scale RBF kernel (matches MMDLoss(RBF()).forward)."""
    n_x, d = x.shape
    n_y, d_y = y.shape
    assert d == d_y
    n_tot = n_x + n_y

    # bandwidth_multipliers = mul_factor ** (arange(n_kernels) - n_kernels // 2)
    multipliers = tuple(
        float(mul_factor) ** (i - n_kernels // 2) for i in range(n_kernels))
    use_pow2 = (n_kernels == 5 and float(mul_factor) == 2.0)

    xf = x.astype(jnp.float32)
    yf = y.astype(jnp.float32)

    # Center the stacked data: pairwise distances are translation invariant,
    # and the analytic bandwidth formula becomes exact & cancellation-free.
    mu = (jnp.sum(xf, axis=0) + jnp.sum(yf, axis=0)) * (1.0 / n_tot)
    xc = xf - mu
    yc = yf - mu

    sq_x = jnp.sum(xc * xc, axis=-1)          # (n_x,)
    sq_y = jnp.sum(yc * yc, axis=-1)          # (n_y,)

    if bandwidth is None:
        # sum_{i,j} ||z_i - z_j||^2 = 2 * N * sum_i ||z_i - mean||^2
        sum_d2 = 2.0 * float(n_tot) * (jnp.sum(sq_x) + jnp.sum(sq_y))
        bw = sum_d2 / float(n_tot * n_tot - n_tot)
    else:
        bw = jnp.asarray(bandwidth, jnp.float32)
    inv_bw = 1.0 / bw

    # t_base = -d2 * base; pow2 path folds the smallest multiplier (1/4) in.
    base = inv_bw * (0.25 if use_pow2 else 1.0)

    # Tile selection: pad the stacked sample axis to a multiple of the tile.
    # Tiles are lane/MXU aligned (multiples of 128, 256 default).
    tile = max(128, min(int(block_size), _round_up(n_tot, 128)))
    tile = _round_up(tile, 128)
    n_pad = _round_up(n_tot, tile)

    z = jnp.concatenate([xc, yc], axis=0)                       # (n_tot, d) f32
    sq = jnp.concatenate([sq_x, sq_y], axis=0)                  # (n_tot,)
    a = jnp.concatenate(
        [jnp.full((n_x,), 1.0 / n_x, jnp.float32),
         jnp.full((n_y,), -1.0 / n_y, jnp.float32)], axis=0)    # (n_tot,)

    pad = n_pad - n_tot
    if pad:
        z = jnp.pad(z, ((0, pad), (0, 0)))
        sq = jnp.pad(sq, ((0, pad),))
        a = jnp.pad(a, ((0, pad),))

    # Fold the bandwidth into the operands once (O(N*D) / O(N)): the kernel
    # then needs no scalar inputs and no per-element scaling.
    matmul_dtype = jnp.bfloat16 if use_bf16_matmul else jnp.float32
    z_rows = (z * (2.0 * base)).astype(matmul_dtype)
    z_cols = z.astype(matmul_dtype)
    sqs = sq * base

    sq_row = sqs.reshape(n_pad, 1)
    sq_col = sqs.reshape(1, n_pad)
    a_row = a.reshape(n_pad, 1)
    a_col = a.reshape(1, n_pad)

    grid_r = n_pad // tile
    grid_c = n_pad // tile

    kernel = functools.partial(
        _mmd_tile_kernel, multipliers=multipliers, use_pow2=use_pow2)

    partials = pl.pallas_call(
        kernel,
        out_shape=jax.ShapeDtypeStruct((grid_r, 8, 128), jnp.float32),
        grid_spec=pltpu.PrefetchScalarGridSpec(
            num_scalar_prefetch=0,
            grid=(grid_r, grid_c),
            in_specs=[
                pl.BlockSpec((tile, d), lambda i, j: (i, 0)),   # Z rows (pre-scaled)
                pl.BlockSpec((tile, d), lambda i, j: (j, 0)),   # Z cols
                pl.BlockSpec((tile, 1), lambda i, j: (i, 0)),   # sq' rows
                pl.BlockSpec((1, tile), lambda i, j: (0, j)),   # sq' cols (pre-T)
                pl.BlockSpec((tile, 1), lambda i, j: (i, 0)),   # weights rows
                pl.BlockSpec((1, tile), lambda i, j: (0, j)),   # weights cols
            ],
            out_specs=pl.BlockSpec((1, 8, 128), lambda i, j: (i, 0, 0)),
        ),
        compiler_params=pltpu.CompilerParams(
            dimension_semantics=("parallel", "arbitrary")),
    )(z_rows, z_cols, sq_row, sq_col, a_row, a_col)

    # Every element of a row-tile block equals that tile's partial sum.
    return jnp.sum(partials[:, 0, 0])


if __name__ == "__main__":
    key = jax.random.PRNGKey(0)
    kx, ky = jax.random.split(key)
    # small shapes: 8 samples each, 32 features
    X = jax.random.normal(kx, (8, 32), dtype=jnp.float32)
    Y = jax.random.normal(ky, (8, 32), dtype=jnp.float32) + 0.5

    loss = mmd_loss(X, Y)
    jax.block_until_ready(loss)

    # pure-JAX reference check (mirrors the PyTorch module)
    Z = jnp.concatenate([X, Y], axis=0)
    D2 = jnp.sum((Z[:, None, :] - Z[None, :, :]) ** 2, axis=-1)
    N = Z.shape[0]
    bw = jnp.sum(D2) / (N * N - N)
    mults = jnp.array([2.0 ** (i - 2) for i in range(5)], jnp.float32)
    K = jnp.sum(jnp.exp(-D2[None, ...] / (bw * mults)[:, None, None]), axis=0)
    n = X.shape[0]
    ref = K[:n, :n].mean() - 2 * K[:n, n:].mean() + K[n:, n:].mean()

    assert jnp.allclose(loss, ref, rtol=1e-4, atol=1e-5), (loss, ref)
    print("KERNEL_OK")
</pallas_src>

<mosaic_0001>
module attributes {stable_mosaic.version = 11 : i64} {
  func.func @_mmd_tile_kernel(%arg0: i32, %arg1: i32, %arg2: memref<128x32xf32, #tpu.memory_space<vmem>>, %arg3: memref<128x32xf32, #tpu.memory_space<vmem>>, %arg4: memref<128x1xf32, #tpu.memory_space<vmem>>, %arg5: memref<1x128xf32, #tpu.memory_space<vmem>>, %arg6: memref<128x1xf32, #tpu.memory_space<vmem>>, %arg7: memref<1x128xf32, #tpu.memory_space<vmem>>, %arg8: memref<1x8x128xf32, #tpu.memory_space<vmem>>) attributes {dimension_semantics = [#tpu.dimension_semantics<parallel>, #tpu.dimension_semantics<arbitrary>], iteration_bounds = array<i64: 1, 1>, scalar_prefetch = 0 : i64, scratch_operands = 0 : i64, tpu.core_type = #tpu.core_type<tc>, window_params = [{transform_indices = @transform_0, window_bounds = array<i64: 128, 32>}, {transform_indices = @transform_1, window_bounds = array<i64: 128, 32>}, {transform_indices = @transform_2, window_bounds = array<i64: 128, 1>}, {transform_indices = @transform_3, window_bounds = array<i64: 1, 128>}, {transform_indices = @transform_4, window_bounds = array<i64: 128, 1>}, {transform_indices = @transform_5, window_bounds = array<i64: 1, 128>}, {transform_indices = @transform_6, window_bounds = array<i64: 1, 8, 128>}]} {
    %c0_i32 = arith.constant 0 : i32
    %0 = arith.cmpi eq, %arg1, %c0_i32 : i32
    %1 = arith.extui %0 : i1 to i32
    %c0_i32_0 = arith.constant 0 : i32
    %2 = arith.cmpi ne, %1, %c0_i32_0 : i32
    scf.if %2 {
      %cst_20 = arith.constant 0.000000e+00 : f32
      %37 = vector.broadcast %cst_20 : f32 to vector<1x8x128xf32>
      %c0_21 = arith.constant 0 : index
      %c0_22 = arith.constant 0 : index
      %c0_23 = arith.constant 0 : index
      %38 = vector.load %arg8[%c0_21, %c0_22, %c0_23] : memref<1x8x128xf32, #tpu.memory_space<vmem>>, vector<1x8x128xf32>
      tpu.vector_store %arg8[%c0_21, %c0_22, %c0_23], %37 {strides = array<i32>} : memref<1x8x128xf32, #tpu.memory_space<vmem>>, vector<1x8x128xf32>,
    } else {
    }
    %c0 = arith.constant 0 : index
    %c0_1 = arith.constant 0 : index
    %3 = vector.load %arg2[%c0, %c0_1] : memref<128x32xf32, #tpu.memory_space<vmem>>, vector<128x32xf32>
    %c0_2 = arith.constant 0 : index
    %c0_3 = arith.constant 0 : index
    %4 = vector.load %arg3[%c0_2, %c0_3] : memref<128x32xf32, #tpu.memory_space<vmem>>, vector<128x32xf32>
    %cst = arith.constant dense<0.000000e+00> : vector<128x128xf32>
    %5 = tpu.matmul %3, %4, %cst {dimension_numbers = #tpu.dot_dimension_numbers<[1], [1], [0], [0], [0, 0, 1, 0], [], []>} : vector<128x32xf32>, vector<128x32xf32>, vector<128x128xf32> -> vector<128x128xf32>
    %c0_4 = arith.constant 0 : index
    %c0_5 = arith.constant 0 : index
    %6 = vector.load %arg4[%c0_4, %c0_5] : memref<128x1xf32, #tpu.memory_space<vmem>>, vector<128x1xf32>
    %7 = vector.broadcast %6 : vector<128x1xf32> to vector<128x128xf32>
    %8 = arith.subf %5, %7 : vector<128x128xf32>
    %c0_6 = arith.constant 0 : index
    %c0_7 = arith.constant 0 : index
    %9 = vector.load %arg5[%c0_6, %c0_7] : memref<1x128xf32, #tpu.memory_space<vmem>>, vector<1x128xf32>
    %10 = vector.broadcast %9 : vector<1x128xf32> to vector<128x128xf32>
    %11 = arith.subf %8, %10 : vector<128x128xf32>
    %cst_8 = arith.constant 0.000000e+00 : f32
    %12 = vector.broadcast %cst_8 : f32 to vector<128x128xf32>
    %13 = arith.minimumf %11, %12 : vector<128x128xf32>
    %14 = math.exp %13 : vector<128x128xf32>
    %15 = arith.mulf %14, %14 : vector<128x128xf32>
    %16 = arith.mulf %15, %15 : vector<128x128xf32>
    %17 = arith.mulf %16, %16 : vector<128x128xf32>
    %18 = arith.mulf %17, %17 : vector<128x128xf32>
    %19 = arith.addf %18, %17 : vector<128x128xf32>
    %20 = arith.addf %19, %16 : vector<128x128xf32>
    %21 = arith.addf %20, %15 : vector<128x128xf32>
    %22 = arith.addf %21, %14 : vector<128x128xf32>
    %c0_9 = arith.constant 0 : index
    %c0_10 = arith.constant 0 : index
    %23 = vector.load %arg6[%c0_9, %c0_10] : memref<128x1xf32, #tpu.memory_space<vmem>>, vector<128x1xf32>
    %24 = vector.broadcast %23 : vector<128x1xf32> to vector<128x128xf32>
    %25 = arith.mulf %24, %22 : vector<128x128xf32>
    %c0_11 = arith.constant 0 : index
    %c0_12 = arith.constant 0 : index
    %26 = vector.load %arg7[%c0_11, %c0_12] : memref<1x128xf32, #tpu.memory_space<vmem>>, vector<1x128xf32>
    %27 = vector.broadcast %26 : vector<1x128xf32> to vector<128x128xf32>
    %28 = arith.mulf %25, %27 : vector<128x128xf32>
    %29 = vector.shape_cast %28 : vector<128x128xf32> to vector<1x128x128xf32>
    %cst_13 = arith.constant dense<0.000000e+00> : vector<1xf32>
    %30 = vector.multi_reduction <add>, %29, %cst_13 [1, 2] : vector<1x128x128xf32> to vector<1xf32>
    %31 = vector.shape_cast %30 : vector<1xf32> to vector<1x1x1xf32>
    %32 = vector.extract %31[0, 0, 0] : f32 from vector<1x1x1xf32>
    %c0_14 = arith.constant 0 : index
    %c0_15 = arith.constant 0 : index
    %c0_16 = arith.constant 0 : index
    %33 = vector.load %arg8[%c0_14, %c0_15, %c0_16] : memref<1x8x128xf32, #tpu.memory_space<vmem>>, vector<1x8x128xf32>
    %34 = vector.broadcast %32 : f32 to vector<1x8x128xf32>
    %35 = arith.addf %33, %34 : vector<1x8x128xf32>
    %c0_17 = arith.constant 0 : index
    %c0_18 = arith.constant 0 : index
    %c0_19 = arith.constant 0 : index
    %36 = vector.load %arg8[%c0_17, %c0_18, %c0_19] : memref<1x8x128xf32, #tpu.memory_space<vmem>>, vector<1x8x128xf32>
    tpu.vector_store %arg8[%c0_17, %c0_18, %c0_19], %35 {strides = array<i32>} : memref<1x8x128xf32, #tpu.memory_space<vmem>>, vector<1x8x128xf32>,
    return
  }
  func.func @transform_0(%arg0: i32, %arg1: i32) -> (i32, i32) {
    %c0_i32 = arith.constant 0 : i32
    %c0_i32_0 = arith.constant 0 : i32
    return %arg0, %c0_i32 : i32, i32
  }
  func.func @transform_1(%arg0: i32, %arg1: i32) -> (i32, i32) {
    %c0_i32 = arith.constant 0 : i32
    %c0_i32_0 = arith.constant 0 : i32
    return %arg1, %c0_i32 : i32, i32
  }
  func.func @transform_2(%arg0: i32, %arg1: i32) -> (i32, i32) {
    %c0_i32 = arith.constant 0 : i32
    %c0_i32_0 = arith.constant 0 : i32
    return %arg0, %c0_i32 : i32, i32
  }
  func.func @transform_3(%arg0: i32, %arg1: i32) -> (i32, i32) {
    %c0_i32 = arith.constant 0 : i32
    %c0_i32_0 = arith.constant 0 : i32
    return %c0_i32, %arg1 : i32, i32
  }
  func.func @transform_4(%arg0: i32, %arg1: i32) -> (i32, i32) {
    %c0_i32 = arith.constant 0 : i32
    %c0_i32_0 = arith.constant 0 : i32
    return %arg0, %c0_i32 : i32, i32
  }
  func.func @transform_5(%arg0: i32, %arg1: i32) -> (i32, i32) {
    %c0_i32 = arith.constant 0 : i32
    %c0_i32_0 = arith.constant 0 : i32
    return %c0_i32, %arg1 : i32, i32
  }
  func.func @transform_6(%arg0: i32, %arg1: i32) -> (i32, i32, i32) {
    %c0_i32 = arith.constant 0 : i32
    %c0_i32_0 = arith.constant 0 : i32
    %c0_i32_1 = arith.constant 0 : i32
    return %arg0, %c0_i32, %c0_i32_0 : i32, i32, i32
  }
}

</mosaic_0001>

<llo_original>
// kernel: tpu_custom_call.1
$region0: #{tpu_custom_call.1}
  #allocation0 [shape = 'u32[]', space=smem, size = 0x4, offset = 0x4, fixed_abs, tag = 'smem constant byte address 0x4 - core index']
  #allocation1 [shape = 'u32[72,128]{1,0:T(1,128)}', space=vmem, size = 0x9000, scoped, tag = 'internal scratch']
  %s0 = inlined_call_operand.vmem [shape: f32[128,32], index: 0, kind: input, shape index: {}]
  %s1 = inlined_call_operand.vmem [shape: f32[128,32], index: 1, kind: input, shape index: {}]
  %s2 = inlined_call_operand.vmem [shape: f32[128,1], index: 2, kind: input, shape index: {}]
  %s3 = inlined_call_operand.vmem [shape: f32[1,128], index: 3, kind: input, shape index: {}]
  %s4 = inlined_call_operand.vmem [shape: f32[128,1], index: 4, kind: input, shape index: {}]
  %s5 = inlined_call_operand.vmem [shape: f32[1,128], index: 5, kind: input, shape index: {}]
  %s6 = inlined_call_operand.hbm [shape: f32[1,8,128], index: 6, kind: output, shape index: {}]
  %s7 = sld [smem:[#allocation0]]
  $region38: #{tpu_custom_call.1} parent=0
    _
  %s9 = ssub.s32 1, %s7
  %s10 = scalar_select 0, %s9, %s7
  $region1: #{tpu_custom_call.1} parent=0
    #allocation2 [shape = 'u8[4096]{0}', space=vmem, size = 0x1000, scoped, tag = 'output window, operand 0, single buffered']
    #allocation3 [shape = 's32[1]{0}', space=sflag, size = 0x4, scoped, tag = 'scoped memory for tpu_custom_call.1']
    %11 = vsyncpa [#allocation3], 0
    // Predicated region
    $region2: #{tpu_custom_call.1} parent=1 // pred_check
      _
    $region3: #{tpu_custom_call.1} parent=1 // pred_check_branch
      %13 = sbr.rel (0) target = $region5
    $region4: #{tpu_custom_call.1} parent=1 // pred_region
      _
    $region5: #{tpu_custom_call.1} parent=1 // pred_fallthru
      _
    // Predicated region
    $region6: #{tpu_custom_call.1} parent=1 // pred_check
      _
    $region7: #{tpu_custom_call.1} parent=1 // pred_check_branch
      %15 = sbr.rel (0) target = $region9
    $region8: #{tpu_custom_call.1} parent=1 // pred_region
      _
    $region9: #{tpu_custom_call.1} parent=1 // pred_fallthru
      _
    // Predicated region
    $region10: #{tpu_custom_call.1} parent=1 // pred_check
      _
    $region11: #{tpu_custom_call.1} parent=1 // pred_check_branch
      %17 = sbr.rel (0) target = $region13
    $region12: #{tpu_custom_call.1} parent=1 // pred_region
      _
    $region13: #{tpu_custom_call.1} parent=1 // pred_fallthru
      _
    // Predicated region
    $region14: #{tpu_custom_call.1} parent=1 // pred_check
      _
    $region15: #{tpu_custom_call.1} parent=1 // pred_check_branch
      %19 = sbr.rel (0) target = $region17
    $region16: #{tpu_custom_call.1} parent=1 // pred_region
      _
    $region17: #{tpu_custom_call.1} parent=1 // pred_fallthru
      _
    // Predicated region
    $region18: #{tpu_custom_call.1} parent=1 // pred_check
      _
    $region19: #{tpu_custom_call.1} parent=1 // pred_check_branch
      %21 = sbr.rel (0) target = $region21
    $region20: #{tpu_custom_call.1} parent=1 // pred_region
      _
    $region21: #{tpu_custom_call.1} parent=1 // pred_fallthru
      _
    // Predicated region
    $region22: #{tpu_custom_call.1} parent=1 // pred_check
      _
    $region23: #{tpu_custom_call.1} parent=1 // pred_check_branch
      %23 = sbr.rel (0) target = $region25
    $region24: #{tpu_custom_call.1} parent=1 // pred_region
      _
    $region25: #{tpu_custom_call.1} parent=1 // pred_fallthru
      _
    %p24 = scmp.eq.s32.totalorder 0, 0
    // Predicated region
    $region26: #{tpu_custom_call.1} parent=1 // pred_check
      %p25 = pneg %p24
    $region27: #{tpu_custom_call.1} parent=1 // pred_check_branch
      %27 = sbr.rel (%p25) target = $region29
    $region28: #{tpu_custom_call.1} parent=1 // pred_region
      %28 = vst [vmem:[#allocation2] sm:$0xff] 0.0
    $region29: #{tpu_custom_call.1} parent=1 // pred_fallthru
      _
    %v29 = vld [vmem:[%s0] sm:$0xff]
    %v30 = vld [vmem:[%s0 + $0x8] sm:$0xff]
    %v31 = vld [vmem:[%s0 + $0x10] sm:$0xff]
    %v32 = vld [vmem:[%s0 + $0x18] sm:$0xff]
    %v33 = vld [vmem:[%s0 + $0x20] sm:$0xff]
    %v34 = vld [vmem:[%s0 + $0x28] sm:$0xff]
    %v35 = vld [vmem:[%s0 + $0x30] sm:$0xff]
    %v36 = vld [vmem:[%s0 + $0x38] sm:$0xff]
    %v37 = vld [vmem:[%s0 + $0x40] sm:$0xff]
    %v38 = vld [vmem:[%s0 + $0x48] sm:$0xff]
    %v39 = vld [vmem:[%s0 + $0x50] sm:$0xff]
    %v40 = vld [vmem:[%s0 + $0x58] sm:$0xff]
    %v41 = vld [vmem:[%s0 + $0x60] sm:$0xff]
    %v42 = vld [vmem:[%s0 + $0x68] sm:$0xff]
    %v43 = vld [vmem:[%s0 + $0x70] sm:$0xff]
    %v44 = vld [vmem:[%s0 + $0x78] sm:$0xff]
    %v45 = vld [vmem:[%s1] sm:$0xff]
    %v46 = vld [vmem:[%s1 + $0x8] sm:$0xff]
    %v47 = vld [vmem:[%s1 + $0x10] sm:$0xff]
    %v48 = vld [vmem:[%s1 + $0x18] sm:$0xff]
    %v49 = vld [vmem:[%s1 + $0x20] sm:$0xff]
    %v50 = vld [vmem:[%s1 + $0x28] sm:$0xff]
    %v51 = vld [vmem:[%s1 + $0x30] sm:$0xff]
    %v52 = vld [vmem:[%s1 + $0x38] sm:$0xff]
    %v53 = vld [vmem:[%s1 + $0x40] sm:$0xff]
    %v54 = vld [vmem:[%s1 + $0x48] sm:$0xff]
    %v55 = vld [vmem:[%s1 + $0x50] sm:$0xff]
    %v56 = vld [vmem:[%s1 + $0x58] sm:$0xff]
    %v57 = vld [vmem:[%s1 + $0x60] sm:$0xff]
    %v58 = vld [vmem:[%s1 + $0x68] sm:$0xff]
    %v59 = vld [vmem:[%s1 + $0x70] sm:$0xff]
    %v60 = vld [vmem:[%s1 + $0x78] sm:$0xff]
    %vm61 = vcmask 261120
    %v63 = vsel %vm61, %v29, 0
    %v66 = vsel %vm61, %v30, 0
    %v69 = vsel %vm61, %v31, 0
    %v72 = vsel %vm61, %v32, 0
    %v75 = vsel %vm61, %v33, 0
    %v78 = vsel %vm61, %v34, 0
    %v81 = vsel %vm61, %v35, 0
    %v84 = vsel %vm61, %v36, 0
    %v87 = vsel %vm61, %v37, 0
    %v90 = vsel %vm61, %v38, 0
    %v93 = vsel %vm61, %v39, 0
    %v96 = vsel %vm61, %v40, 0
    %v99 = vsel %vm61, %v41, 0
    %v102 = vsel %vm61, %v42, 0
    %v105 = vsel %vm61, %v43, 0
    %v108 = vsel %vm61, %v44, 0
    %v111 = vsel %vm61, %v45, 0
    %v114 = vsel %vm61, %v46, 0
    %v117 = vsel %vm61, %v47, 0
    %v120 = vsel %vm61, %v48, 0
    %v123 = vsel %vm61, %v49, 0
    %v126 = vsel %vm61, %v50, 0
    %v129 = vsel %vm61, %v51, 0
    %v132 = vsel %vm61, %v52, 0
    %v135 = vsel %vm61, %v53, 0
    %v138 = vsel %vm61, %v54, 0
    %v141 = vsel %vm61, %v55, 0
    %v144 = vsel %vm61, %v56, 0
    %v147 = vsel %vm61, %v57, 0
    %v150 = vsel %vm61, %v58, 0
    %v153 = vsel %vm61, %v59, 0
    %v156 = vsel %vm61, %v60, 0
    %158 = vmatpush.xpose.msra.mxu0 %v156
    %159 = vmatpush.xpose.msra.mxu0 %v153
    %160 = vmatpush.xpose.msra.mxu0 %v150
    %161 = vmatpush.xpose.msra.mxu0 %v147
    %162 = vmatpush.xpose.msra.mxu0 %v144
    %163 = vmatpush.xpose.msra.mxu0 %v141
    %164 = vmatpush.xpose.msra.mxu0 %v138
    %165 = vmatpush.xpose.msra.mxu0 %v135
    %166 = vmatpush.xpose.msra.mxu0 %v132
    %167 = vmatpush.xpose.msra.mxu0 %v129
    %168 = vmatpush.xpose.msra.mxu0 %v126
    %169 = vmatpush.xpose.msra.mxu0 %v123
    %170 = vmatpush.xpose.msra.mxu0 %v120
    %171 = vmatpush.xpose.msra.mxu0 %v117
    %172 = vmatpush.xpose.msra.mxu0 %v114
    %173 = vmatpush.xpose.msra.mxu0 %v111
    %174 = vmatmul.f32.gmra.mxu0 %v63
    %v175 = vpop.f32.mrf.mxu0
    %v176 = vadd.f32 0.0, %v175
    %177 = vmatmul.f32.gmra.mxu0 %v66
    %v178 = vpop.f32.mrf.mxu0
    %v179 = vadd.f32 0.0, %v178
    %180 = vmatmul.f32.gmra.mxu0 %v69
    %v181 = vpop.f32.mrf.mxu0
    %v182 = vadd.f32 0.0, %v181
    %183 = vmatmul.f32.gmra.mxu0 %v72
    %v184 = vpop.f32.mrf.mxu0
    %v185 = vadd.f32 0.0, %v184
    %186 = vmatmul.f32.gmra.mxu0 %v75
    %v187 = vpop.f32.mrf.mxu0
    %v188 = vadd.f32 0.0, %v187
    %189 = vmatmul.f32.gmra.mxu0 %v78
    %v190 = vpop.f32.mrf.mxu0
    %v191 = vadd.f32 0.0, %v190
    %192 = vmatmul.f32.gmra.mxu0 %v81
    %v193 = vpop.f32.mrf.mxu0
    %v194 = vadd.f32 0.0, %v193
    %195 = vmatmul.f32.gmra.mxu0 %v84
    %v196 = vpop.f32.mrf.mxu0
    %v197 = vadd.f32 0.0, %v196
    %198 = vmatmul.f32.gmra.mxu0 %v87
    %v199 = vpop.f32.mrf.mxu0
    %v200 = vadd.f32 0.0, %v199
    %201 = vmatmul.f32.gmra.mxu0 %v90
    %v202 = vpop.f32.mrf.mxu0
    %v203 = vadd.f32 0.0, %v202
    %204 = vmatmul.f32.gmra.mxu0 %v93
    %v205 = vpop.f32.mrf.mxu0
    %v206 = vadd.f32 0.0, %v205
    %207 = vmatmul.f32.gmra.mxu0 %v96
    %v208 = vpop.f32.mrf.mxu0
    %v209 = vadd.f32 0.0, %v208
    %210 = vmatmul.f32.gmra.mxu0 %v99
    %v211 = vpop.f32.mrf.mxu0
    %v212 = vadd.f32 0.0, %v211
    %213 = vmatmul.f32.gmra.mxu0 %v102
    %v214 = vpop.f32.mrf.mxu0
    %v215 = vadd.f32 0.0, %v214
    %216 = vmatmul.f32.gmra.mxu0 %v105
    %v217 = vpop.f32.mrf.mxu0
    %v218 = vadd.f32 0.0, %v217
    %219 = vmatmul.f32.gmra.mxu0 %v108
    %v220 = vpop.f32.mrf.mxu0
    %v221 = vadd.f32 0.0, %v220
    %222 = vdwg.mxu0
    %v223 = vld [vmem:[%s2] sm:$0xff]
    %v224 = vld [vmem:[%s2 + $0x8] sm:$0xff]
    %v225 = vld [vmem:[%s2 + $0x10] sm:$0xff]
    %v226 = vld [vmem:[%s2 + $0x18] sm:$0xff]
    %v227 = vld [vmem:[%s2 + $0x20] sm:$0xff]
    %v228 = vld [vmem:[%s2 + $0x28] sm:$0xff]
    %v229 = vld [vmem:[%s2 + $0x30] sm:$0xff]
    %v230 = vld [vmem:[%s2 + $0x38] sm:$0xff]
    %v231 = vld [vmem:[%s2 + $0x40] sm:$0xff]
    %v232 = vld [vmem:[%s2 + $0x48] sm:$0xff]
    %v233 = vld [vmem:[%s2 + $0x50] sm:$0xff]
    %v234 = vld [vmem:[%s2 + $0x58] sm:$0xff]
    %v235 = vld [vmem:[%s2 + $0x60] sm:$0xff]
    %v236 = vld [vmem:[%s2 + $0x68] sm:$0xff]
    %v237 = vld [vmem:[%s2 + $0x70] sm:$0xff]
    %v238 = vld [vmem:[%s2 + $0x78] sm:$0xff]
    %240 = vset.pattern.permute.xlu0 0
    %241 = vperm.xlu0 %240, %v223
    %v242 = vpop.permute.xlu0 %241
    %245 = vset.pattern.permute.xlu0 0
    %246 = vperm.xlu0 %245, %v224
    %v247 = vpop.permute.xlu0 %246
    %250 = vset.pattern.permute.xlu0 0
    %251 = vperm.xlu0 %250, %v225
    %v252 = vpop.permute.xlu0 %251
    %255 = vset.pattern.permute.xlu0 0
    %256 = vperm.xlu0 %255, %v226
    %v257 = vpop.permute.xlu0 %256
    %260 = vset.pattern.permute.xlu0 0
    %261 = vperm.xlu0 %260, %v227
    %v262 = vpop.permute.xlu0 %261
    %265 = vset.pattern.permute.xlu0 0
    %266 = vperm.xlu0 %265, %v228
    %v267 = vpop.permute.xlu0 %266
    %270 = vset.pattern.permute.xlu0 0
    %271 = vperm.xlu0 %270, %v229
    %v272 = vpop.permute.xlu0 %271
    %275 = vset.pattern.permute.xlu0 0
    %276 = vperm.xlu0 %275, %v230
    %v277 = vpop.permute.xlu0 %276
    %280 = vset.pattern.permute.xlu0 0
    %281 = vperm.xlu0 %280, %v231
    %v282 = vpop.permute.xlu0 %281
    %285 = vset.pattern.permute.xlu0 0
    %286 = vperm.xlu0 %285, %v232
    %v287 = vpop.permute.xlu0 %286
    %290 = vset.pattern.permute.xlu0 0
    %291 = vperm.xlu0 %290, %v233
    %v292 = vpop.permute.xlu0 %291
    %295 = vset.pattern.permute.xlu0 0
    %296 = vperm.xlu0 %295, %v234
    %v297 = vpop.permute.xlu0 %296
    %300 = vset.pattern.permute.xlu0 0
    %301 = vperm.xlu0 %300, %v235
    %v302 = vpop.permute.xlu0 %301
    %305 = vset.pattern.permute.xlu0 0
    %306 = vperm.xlu0 %305, %v236
    %v307 = vpop.permute.xlu0 %306
    %310 = vset.pattern.permute.xlu0 0
    %311 = vperm.xlu0 %310, %v237
    %v312 = vpop.permute.xlu0 %311
    %315 = vset.pattern.permute.xlu0 0
    %316 = vperm.xlu0 %315, %v238
    %v317 = vpop.permute.xlu0 %316
    %v319 = vsub.f32 %v176, %v242
    %v320 = vsub.f32 %v179, %v247
    %v321 = vsub.f32 %v182, %v252
    %v322 = vsub.f32 %v185, %v257
    %v323 = vsub.f32 %v188, %v262
    %v324 = vsub.f32 %v191, %v267
    %v325 = vsub.f32 %v194, %v272
    %v326 = vsub.f32 %v197, %v277
    %v327 = vsub.f32 %v200, %v282
    %v328 = vsub.f32 %v203, %v287
    %v329 = vsub.f32 %v206, %v292
    %v330 = vsub.f32 %v209, %v297
    %v331 = vsub.f32 %v212, %v302
    %v332 = vsub.f32 %v215, %v307
    %v333 = vsub.f32 %v218, %v312
    %v334 = vsub.f32 %v221, %v317
    %v335 = vld [vmem:[%s3] sm:$0x1]
    %v337 = vperm.slane %v335, 0
    %v339 = vsub.f32 %v319, %v337
    %v340 = vsub.f32 %v320, %v337
    %v341 = vsub.f32 %v321, %v337
    %v342 = vsub.f32 %v322, %v337
    %v343 = vsub.f32 %v323, %v337
    %v344 = vsub.f32 %v324, %v337
    %v345 = vsub.f32 %v325, %v337
    %v346 = vsub.f32 %v326, %v337
    %v347 = vsub.f32 %v327, %v337
    %v348 = vsub.f32 %v328, %v337
    %v349 = vsub.f32 %v329, %v337
    %v350 = vsub.f32 %v330, %v337
    %v351 = vsub.f32 %v331, %v337
    %v352 = vsub.f32 %v332, %v337
    %v353 = vsub.f32 %v333, %v337
    %v354 = vsub.f32 %v334, %v337
    %v355 = vmin.f32 %v339, 0.0
    %v356 = vmin.f32 %v340, 0.0
    %v357 = vmin.f32 %v341, 0.0
    %v358 = vmin.f32 %v342, 0.0
    %v359 = vmin.f32 %v343, 0.0
    %v360 = vmin.f32 %v344, 0.0
    %v361 = vmin.f32 %v345, 0.0
    %v362 = vmin.f32 %v346, 0.0
    %v363 = vmin.f32 %v347, 0.0
    %v364 = vmin.f32 %v348, 0.0
    %v365 = vmin.f32 %v349, 0.0
    %v366 = vmin.f32 %v350, 0.0
    %v367 = vmin.f32 %v351, 0.0
    %v368 = vmin.f32 %v352, 0.0
    %v369 = vmin.f32 %v353, 0.0
    %v370 = vmin.f32 %v354, 0.0
    %v371 = vmul.f32 %v355, 1.442695
    %v372 = vpow.pop %v371
    %v373 = vmul.f32 %v356, 1.442695
    %v374 = vpow.pop %v373
    %v375 = vmul.f32 %v357, 1.442695
    %v376 = vpow.pop %v375
    %v377 = vmul.f32 %v358, 1.442695
    %v378 = vpow.pop %v377
    %v379 = vmul.f32 %v359, 1.442695
    %v380 = vpow.pop %v379
    %v381 = vmul.f32 %v360, 1.442695
    %v382 = vpow.pop %v381
    %v383 = vmul.f32 %v361, 1.442695
    %v384 = vpow.pop %v383
    %v385 = vmul.f32 %v362, 1.442695
    %v386 = vpow.pop %v385
    %v387 = vmul.f32 %v363, 1.442695
    %v388 = vpow.pop %v387
    %v389 = vmul.f32 %v364, 1.442695
    %v390 = vpow.pop %v389
    %v391 = vmul.f32 %v365, 1.442695
    %v392 = vpow.pop %v391
    %v393 = vmul.f32 %v366, 1.442695
    %v394 = vpow.pop %v393
    %v395 = vmul.f32 %v367, 1.442695
    %v396 = vpow.pop %v395
    %v397 = vmul.f32 %v368, 1.442695
    %v398 = vpow.pop %v397
    %v399 = vmul.f32 %v369, 1.442695
    %v400 = vpow.pop %v399
    %v401 = vmul.f32 %v370, 1.442695
    %v402 = vpow.pop %v401
    %v403 = vmul.f32 %v372, %v372
    %v404 = vmul.f32 %v374, %v374
    %v405 = vmul.f32 %v376, %v376
    %v406 = vmul.f32 %v378, %v378
    %v407 = vmul.f32 %v380, %v380
    %v408 = vmul.f32 %v382, %v382
    %v409 = vmul.f32 %v384, %v384
    %v410 = vmul.f32 %v386, %v386
    %v411 = vmul.f32 %v388, %v388
    %v412 = vmul.f32 %v390, %v390
    %v413 = vmul.f32 %v392, %v392
    %v414 = vmul.f32 %v394, %v394
    %v415 = vmul.f32 %v396, %v396
    %v416 = vmul.f32 %v398, %v398
    %v417 = vmul.f32 %v400, %v400
    %v418 = vmul.f32 %v402, %v402
    %v419 = vmul.f32 %v403, %v403
    %v420 = vmul.f32 %v404, %v404
    %v421 = vmul.f32 %v405, %v405
    %v422 = vmul.f32 %v406, %v406
    %v423 = vmul.f32 %v407, %v407
    %v424 = vmul.f32 %v408, %v408
    %v425 = vmul.f32 %v409, %v409
    %v426 = vmul.f32 %v410, %v410
    %v427 = vmul.f32 %v411, %v411
    %v428 = vmul.f32 %v412, %v412
    %v429 = vmul.f32 %v413, %v413
    %v430 = vmul.f32 %v414, %v414
    %v431 = vmul.f32 %v415, %v415
    %v432 = vmul.f32 %v416, %v416
    %v433 = vmul.f32 %v417, %v417
    %v434 = vmul.f32 %v418, %v418
    %v435 = vmul.f32 %v419, %v419
    %v436 = vmul.f32 %v420, %v420
    %v437 = vmul.f32 %v421, %v421
    %v438 = vmul.f32 %v422, %v422
    %v439 = vmul.f32 %v423, %v423
    %v440 = vmul.f32 %v424, %v424
    %v441 = vmul.f32 %v425, %v425
    %v442 = vmul.f32 %v426, %v426
    %v443 = vmul.f32 %v427, %v427
    %v444 = vmul.f32 %v428, %v428
    %v445 = vmul.f32 %v429, %v429
    %v446 = vmul.f32 %v430, %v430
    %v447 = vmul.f32 %v431, %v431
    %v448 = vmul.f32 %v432, %v432
    %v449 = vmul.f32 %v433, %v433
    %v450 = vmul.f32 %v434, %v434
    %v451 = vmul.f32 %v435, %v435
    %v452 = vmul.f32 %v436, %v436
    %v453 = vmul.f32 %v437, %v437
    %v454 = vmul.f32 %v438, %v438
    %v455 = vmul.f32 %v439, %v439
    %v456 = vmul.f32 %v440, %v440
    %v457 = vmul.f32 %v441, %v441
    %v458 = vmul.f32 %v442, %v442
    %v459 = vmul.f32 %v443, %v443
    %v460 = vmul.f32 %v444, %v444
    %v461 = vmul.f32 %v445, %v445
    %v462 = vmul.f32 %v446, %v446
    %v463 = vmul.f32 %v447, %v447
    %v464 = vmul.f32 %v448, %v448
    %v465 = vmul.f32 %v449, %v449
    %v466 = vmul.f32 %v450, %v450
    %v467 = vadd.f32 %v451, %v435
    %v468 = vadd.f32 %v452, %v436
    %v469 = vadd.f32 %v453, %v437
    %v470 = vadd.f32 %v454, %v438
    %v471 = vadd.f32 %v455, %v439
    %v472 = vadd.f32 %v456, %v440
    %v473 = vadd.f32 %v457, %v441
    %v474 = vadd.f32 %v458, %v442
    %v475 = vadd.f32 %v459, %v443
    %v476 = vadd.f32 %v460, %v444
    %v477 = vadd.f32 %v461, %v445
    %v478 = vadd.f32 %v462, %v446
    %v479 = vadd.f32 %v463, %v447
    %v480 = vadd.f32 %v464, %v448
    %v481 = vadd.f32 %v465, %v449
    %v482 = vadd.f32 %v466, %v450
    %v483 = vadd.f32 %v467, %v419
    %v484 = vadd.f32 %v468, %v420
    %v485 = vadd.f32 %v469, %v421
    %v486 = vadd.f32 %v470, %v422
    %v487 = vadd.f32 %v471, %v423
    %v488 = vadd.f32 %v472, %v424
    %v489 = vadd.f32 %v473, %v425
    %v490 = vadd.f32 %v474, %v426
    %v491 = vadd.f32 %v475, %v427
    %v492 = vadd.f32 %v476, %v428
    %v493 = vadd.f32 %v477, %v429
    %v494 = vadd.f32 %v478, %v430
    %v495 = vadd.f32 %v479, %v431
    %v496 = vadd.f32 %v480, %v432
    %v497 = vadd.f32 %v481, %v433
    %v498 = vadd.f32 %v482, %v434
    %v499 = vadd.f32 %v483, %v403
    %v500 = vadd.f32 %v484, %v404
    %v501 = vadd.f32 %v485, %v405
    %v502 = vadd.f32 %v486, %v406
    %v503 = vadd.f32 %v487, %v407
    %v504 = vadd.f32 %v488, %v408
    %v505 = vadd.f32 %v489, %v409
    %v506 = vadd.f32 %v490, %v410
    %v507 = vadd.f32 %v491, %v411
    %v508 = vadd.f32 %v492, %v412
    %v509 = vadd.f32 %v493, %v413
    %v510 = vadd.f32 %v494, %v414
    %v511 = vadd.f32 %v495, %v415
    %v512 = vadd.f32 %v496, %v416
    %v513 = vadd.f32 %v497, %v417
    %v514 = vadd.f32 %v498, %v418
    %v515 = vadd.f32 %v499, %v372
    %v516 = vadd.f32 %v500, %v374
    %v517 = vadd.f32 %v501, %v376
    %v518 = vadd.f32 %v502, %v378
    %v519 = vadd.f32 %v503, %v380
    %v520 = vadd.f32 %v504, %v382
    %v521 = vadd.f32 %v505, %v384
    %v522 = vadd.f32 %v506, %v386
    %v523 = vadd.f32 %v507, %v388
    %v524 = vadd.f32 %v508, %v390
    %v525 = vadd.f32 %v509, %v392
    %v526 = vadd.f32 %v510, %v394
    %v527 = vadd.f32 %v511, %v396
    %v528 = vadd.f32 %v512, %v398
    %v529 = vadd.f32 %v513, %v400
    %v530 = vadd.f32 %v514, %v402
    %v531 = vld [vmem:[%s4] sm:$0xff]
    %v532 = vld [vmem:[%s4 + $0x8] sm:$0xff]
    %v533 = vld [vmem:[%s4 + $0x10] sm:$0xff]
    %v534 = vld [vmem:[%s4 + $0x18] sm:$0xff]
    %v535 = vld [vmem:[%s4 + $0x20] sm:$0xff]
    %v536 = vld [vmem:[%s4 + $0x28] sm:$0xff]
    %v537 = vld [vmem:[%s4 + $0x30] sm:$0xff]
    %v538 = vld [vmem:[%s4 + $0x38] sm:$0xff]
    %v539 = vld [vmem:[%s4 + $0x40] sm:$0xff]
    %v540 = vld [vmem:[%s4 + $0x48] sm:$0xff]
    %v541 = vld [vmem:[%s4 + $0x50] sm:$0xff]
    %v542 = vld [vmem:[%s4 + $0x58] sm:$0xff]
    %v543 = vld [vmem:[%s4 + $0x60] sm:$0xff]
    %v544 = vld [vmem:[%s4 + $0x68] sm:$0xff]
    %v545 = vld [vmem:[%s4 + $0x70] sm:$0xff]
    %v546 = vld [vmem:[%s4 + $0x78] sm:$0xff]
    %548 = vset.pattern.permute.xlu0 0
    %549 = vperm.xlu0 %548, %v531
    %v550 = vpop.permute.xlu0 %549
    %553 = vset.pattern.permute.xlu0 0
    %554 = vperm.xlu0 %553, %v532
    %v555 = vpop.permute.xlu0 %554
    %558 = vset.pattern.permute.xlu0 0
    %559 = vperm.xlu0 %558, %v533
    %v560 = vpop.permute.xlu0 %559
    %563 = vset.pattern.permute.xlu0 0
    %564 = vperm.xlu0 %563, %v534
    %v565 = vpop.permute.xlu0 %564
    %568 = vset.pattern.permute.xlu0 0
    %569 = vperm.xlu0 %568, %v535
    %v570 = vpop.permute.xlu0 %569
    %573 = vset.pattern.permute.xlu0 0
    %574 = vperm.xlu0 %573, %v536
    %v575 = vpop.permute.xlu0 %574
    %578 = vset.pattern.permute.xlu0 0
    %579 = vperm.xlu0 %578, %v537
    %v580 = vpop.permute.xlu0 %579
    %583 = vset.pattern.permute.xlu0 0
    %584 = vperm.xlu0 %583, %v538
    %v585 = vpop.permute.xlu0 %584
    %588 = vset.pattern.permute.xlu0 0
    %589 = vperm.xlu0 %588, %v539
    %v590 = vpop.permute.xlu0 %589
    %593 = vset.pattern.permute.xlu0 0
    %594 = vperm.xlu0 %593, %v540
    %v595 = vpop.permute.xlu0 %594
    %598 = vset.pattern.permute.xlu0 0
    %599 = vperm.xlu0 %598, %v541
    %v600 = vpop.permute.xlu0 %599
    %603 = vset.pattern.permute.xlu0 0
    %604 = vperm.xlu0 %603, %v542
    %v605 = vpop.permute.xlu0 %604
    %608 = vset.pattern.permute.xlu0 0
    %609 = vperm.xlu0 %608, %v543
    %v610 = vpop.permute.xlu0 %609
    %613 = vset.pattern.permute.xlu0 0
    %614 = vperm.xlu0 %613, %v544
    %v615 = vpop.permute.xlu0 %614
    %618 = vset.pattern.permute.xlu0 0
    %619 = vperm.xlu0 %618, %v545
    %v620 = vpop.permute.xlu0 %619
    %623 = vset.pattern.permute.xlu0 0
    %624 = vperm.xlu0 %623, %v546
    %v625 = vpop.permute.xlu0 %624
    %v627 = vmul.f32 %v550, %v515
    %v628 = vmul.f32 %v555, %v516
    %v629 = vmul.f32 %v560, %v517
    %v630 = vmul.f32 %v565, %v518
    %v631 = vmul.f32 %v570, %v519
    %v632 = vmul.f32 %v575, %v520
    %v633 = vmul.f32 %v580, %v521
    %v634 = vmul.f32 %v585, %v522
    %v635 = vmul.f32 %v590, %v523
    %v636 = vmul.f32 %v595, %v524
    %v637 = vmul.f32 %v600, %v525
    %v638 = vmul.f32 %v605, %v526
    %v639 = vmul.f32 %v610, %v527
    %v640 = vmul.f32 %v615, %v528
    %v641 = vmul.f32 %v620, %v529
    %v642 = vmul.f32 %v625, %v530
    %v643 = vld [vmem:[%s5] sm:$0x1]
    %v645 = vperm.slane %v643, 0
    %v647 = vmul.f32 %v627, %v645
    %v648 = vmul.f32 %v628, %v645
    %v649 = vmul.f32 %v629, %v645
    %v650 = vmul.f32 %v630, %v645
    %v651 = vmul.f32 %v631, %v645
    %v652 = vmul.f32 %v632, %v645
    %v653 = vmul.f32 %v633, %v645
    %v654 = vmul.f32 %v634, %v645
    %v655 = vmul.f32 %v635, %v645
    %v656 = vmul.f32 %v636, %v645
    %v657 = vmul.f32 %v637, %v645
    %v658 = vmul.f32 %v638, %v645
    %v659 = vmul.f32 %v639, %v645
    %v660 = vmul.f32 %v640, %v645
    %v661 = vmul.f32 %v641, %v645
    %v662 = vmul.f32 %v642, %v645
    %v663 = vadd.f32 %v647, %v648
    %v664 = vadd.f32 %v663, %v649
    %v665 = vadd.f32 %v664, %v650
    %v666 = vadd.f32 %v665, %v651
    %v667 = vadd.f32 %v666, %v652
    %v668 = vadd.f32 %v667, %v653
    %v669 = vadd.f32 %v668, %v654
    %v670 = vadd.f32 %v669, %v655
    %v671 = vadd.f32 %v670, %v656
    %v672 = vadd.f32 %v671, %v657
    %v673 = vadd.f32 %v672, %v658
    %v674 = vadd.f32 %v673, %v659
    %v675 = vadd.f32 %v674, %v660
    %v676 = vadd.f32 %v675, %v661
    %v677 = vadd.f32 %v676, %v662
    %678 = vadd.xlane.f32.xlu0 %v677
    %v679 = vpop.xlane.xlu0 %678
    %v680 = vrot.slane %v679, 4
    %v681 = vadd.f32 %v679, %v680
    %v682 = vrot.slane %v681, 2
    %v683 = vadd.f32 %v681, %v682
    %v684 = vrot.slane %v683, 1
    %v685 = vadd.f32 %v683, %v684
    %s686 = vtos %v685
    %v687 = vld [vmem:[#allocation2] sm:$0xff]
    %v688 = vstv %s686
    %v689 = vadd.f32 %v687, %v688
    %690 = vst [vmem:[#allocation2] sm:$0xff] %v689
    // Predicated region
    $region30: #{tpu_custom_call.1} parent=1 // pred_check
      _
    $region31: #{tpu_custom_call.1} parent=1 // pred_check_branch
      %692 = sbr.rel (0) target = $region33
    $region32: #{tpu_custom_call.1} parent=1 // pred_region
      %694 = vsyncadd [#allocation3], 0
      %s696 = sshll.u32 [#allocation2], 4
      %s697 = int_to_ptr.vmem [resolvable:$true] %s696
      %s698 = sshll.u32 %s6, 4
      %s699 = int_to_ptr.hbm [resolvable:$true] %s698
      %701 = dma.vmem_to_hbm [thread:$0]  %s697, 128, %s699, [#allocation3]
    $region33: #{tpu_custom_call.1} parent=1 // pred_fallthru
      _
    // Predicated region
    $region34: #{tpu_custom_call.1} parent=1 // pred_check
      _
    $region35: #{tpu_custom_call.1} parent=1 // pred_check_branch
      %703 = sbr.rel (0) target = $region37
    $region36: #{tpu_custom_call.1} parent=1 // pred_region
      %705 = dma.done [#allocation3], 128
    $region37: #{tpu_custom_call.1} parent=1 // pred_fallthru
      _
    %706 = vsyncpa [#allocation3], 1

</llo_original>
